<compile_context>
chip_gen: v5e
topology: v5e:2x2
jax: 0.10.0
libtpu: 0.0.40
codegen_flags: <defaults>
</compile_context>

<pallas_src>
import math

import jax
import jax.numpy as jnp
import numpy as np
from jax.experimental import pallas as pl
from jax.experimental.pallas import tpu as pltpu

PI = math.pi
TWO_PI = 2.0 * math.pi

LANE = 128
SUBLANE = 8


def _round_up(x, m):
    return (x + m - 1) // m * m


def _max_tile_rows():
    """Generation-aware tile cap: 1024 rows on 128-MiB-VMEM parts (v5e/v6e),
    512 rows on 64-MiB parts (v7x) or when the query is unavailable."""
    try:
        info = pltpu.get_tpu_info()
        vmem = getattr(info, "vmem_capacity_bytes", None)
        if vmem is not None and vmem >= (100 << 20):
            return 1024
    except Exception:
        pass
    return 512


def improper_energy_kernel(b_lo_ref, b_hi_ref, slab_ref, bid_ref, out_ref):
    """Hot path: torsion angle + periodic shift + harmonic energy + windowed segment sum.

    b_lo_ref/b_hi_ref: (num_tiles,) i32 SMEM (scalar prefetch) - per-tile structure-id
                       window [b_lo, b_hi) (empty window for all-padding tiles)
    slab_ref: (14, TILE_R, 128) f32  rows 0..11 = atom{0..3} x/y/z, row 12 = x0, row 13 = k
    bid_ref:  (TILE_R, 128)     i32  structure id per interaction (-1 for padding)
    out_ref:  (B, 128)          f32  per-(structure, lane) partial sums for this tile
    """
    i = pl.program_id(0)

    def comp(atom, c):                      # dense (TILE_R, 128) view of one coordinate
        return slab_ref[3 * atom + c]

    def bond(a, b):                         # r_b - r_a as a 3-tuple of (TILE_R, 128)
        return tuple(comp(b, c) - comp(a, c) for c in range(3))

    def cross(u, v):
        return (u[1] * v[2] - u[2] * v[1],
                u[2] * v[0] - u[0] * v[2],
                u[0] * v[1] - u[1] * v[0])

    def dot3(u, v):
        return u[0] * v[0] + u[1] * v[1] + u[2] * v[2]

    b1 = bond(0, 1)
    b2 = bond(1, 2)
    b3 = bond(2, 3)

    n1 = cross(b1, b2)
    n2 = cross(b2, b3)

    cos_t = dot3(n1, n2)
    # exact triple-product identity: m1 . n2 = (n1 x b2_hat) . n2 = -|b2| * (b1 . n2)
    sin_t = -jnp.sqrt(dot3(b2, b2)) * dot3(b1, n2)
    theta = jnp.arctan2(sin_t, cos_t)

    # ShiftedPeriodicHarmonicImpropers.compute_features (kept in where-form so the
    # theta == 0 signed-zero branch matches the reference exactly)
    theta = jnp.where(theta < 0.0, theta + TWO_PI, theta) - PI

    # Harmonic.compute with V0 = 0
    x0 = slab_ref[12]
    k = slab_ref[13]
    energy = k * (theta - x0) ** 2          # (TILE_R, 128)

    # scatter(..., reduce="sum") over mapping_batch, restricted to the structure-id
    # window [b_lo, b_hi) this tile touches -> cost is O(structures per tile), and the
    # live working set per iteration is one (TILE_R, 128) mask + one (B, 128) block
    # (no (B, TILE_R, 128) one-hot tensor, no vreg blow-up with num_structures).
    bid = bid_ref[...]                      # (TILE_R, 128) int32; padding is -1
    out_ref[...] = jnp.zeros_like(out_ref)
    row_ids = jax.lax.broadcasted_iota(jnp.int32, out_ref.shape, 0)   # (B, 128)

    def accum(b, carry):
        contrib = jnp.sum(jnp.where(bid == b, energy, 0.0),
                          axis=0, keepdims=True)                      # (1, 128)
        # lane-aligned full-block RMW (robust lowering; avoids dynamic sublane stores)
        out_ref[...] += jnp.where(row_ids == b, contrib, 0.0)
        return carry

    jax.lax.fori_loop(b_lo_ref[i], b_hi_ref[i], accum, 0)


def shifted_periodic_harmonic_impropers(pos, mapping, mapping_batch, atom_types,
                                        x0_table, k_table, num_structures):
    """Glue: data-dependent gathers + lane-dense packing in XLA, hot path in Pallas."""
    M = mapping.shape[1]

    # --- tiling: sublane-aligned rows of 128 interactions, generation-aware cap ---
    max_tile_rows = _max_tile_rows()
    m_rows = pl.cdiv(M, LANE)
    tile_r = min(_round_up(m_rows, SUBLANE), max_tile_rows)
    # prefer >= 2 tiles so the "parallel" axis can shard across v7x's 2 TensorCores
    if _round_up(m_rows, tile_r) // tile_r == 1 and tile_r >= 2 * SUBLANE:
        tile_r = _round_up(tile_r // 2, SUBLANE)
    m_rows_pad = _round_up(m_rows, tile_r)
    num_tiles = m_rows_pad // tile_r
    m_pad = m_rows_pad * LANE

    # --- data-dependent gathers + lane/sublane-dense packing (XLA glue) ---
    # TODO(synk): move this gather in-kernel (pos resident in VMEM + scalar-prefetched
    # mapping) to remove the HBM slab round-trip.
    p_g = pos[mapping]                                           # (4, M, 3)
    p12 = jnp.transpose(p_g, (0, 2, 1)).reshape(12, M)           # row index = 3*atom + coord

    it = atom_types[mapping]                                     # (4, M)
    x0 = x0_table[it[0], it[1], it[2], it[3]][None, :]           # (1, M)
    kk = k_table[it[0], it[1], it[2], it[3]][None, :]            # (1, M)

    slab = jnp.concatenate([p12, x0, kk], axis=0).astype(jnp.float32)    # (14, M)
    slab3 = jnp.pad(slab, ((0, 0), (0, m_pad - M))).reshape(14, m_rows_pad, LANE)
    bid = jnp.pad(mapping_batch.astype(jnp.int32), (0, m_pad - M),
                  constant_values=-1)                            # -1 => never matches
    bid2 = bid.reshape(m_rows_pad, LANE)

    # --- per-tile structure-id windows [b_lo, b_hi) for the in-kernel segment sum ---
    bid_t = bid.reshape(num_tiles, tile_r * LANE)
    valid = bid_t >= 0
    b_hi = (jnp.max(jnp.where(valid, bid_t, -1), axis=1) + 1).astype(jnp.int32)
    b_lo = jnp.minimum(jnp.min(jnp.where(valid, bid_t, num_structures), axis=1),
                       b_hi).astype(jnp.int32)                   # empty window if all padding

    # --- VMEM budget from actual (double-buffered) blocks + headroom, v7x-safe clamp ---
    block_bytes = 2 * (14 * tile_r * LANE * 4)      # slab input blocks
    block_bytes += 2 * (tile_r * LANE * 4)          # bid input blocks
    block_bytes += 2 * (num_structures * LANE * 4)  # output blocks
    vmem_limit = int(min(max(block_bytes + (8 << 20), 20 << 20), 56 << 20))

    elems = m_rows_pad * LANE
    cost = pl.CostEstimate(
        flops=int(elems * 70),
        transcendentals=int(2 * elems),
        bytes_accessed=int(elems * (14 * 4 + 4)
                           + num_structures * num_tiles * LANE * 4
                           + 2 * num_tiles * 4),
    )

    out = pl.pallas_call(
        improper_energy_kernel,
        out_shape=jax.ShapeDtypeStruct((num_structures, num_tiles * LANE), jnp.float32),
        grid_spec=pltpu.PrefetchScalarGridSpec(
            num_scalar_prefetch=2,
            grid=(num_tiles,),
            in_specs=[
                pl.BlockSpec((14, tile_r, LANE), lambda i, blo, bhi: (0, i, 0)),
                pl.BlockSpec((tile_r, LANE), lambda i, blo, bhi: (i, 0)),
            ],
            out_specs=pl.BlockSpec((num_structures, LANE), lambda i, blo, bhi: (0, i)),
        ),
        compiler_params=pltpu.CompilerParams(
            dimension_semantics=("parallel",),       # independent tiles -> megacore on v7x
            vmem_limit_bytes=vmem_limit,
        ),
        cost_estimate=cost,
    )(b_lo, b_hi, slab3, bid2)

    # reduce per-tile / per-lane lane-dense partials -> per-structure energies
    return jnp.sum(out, axis=1)                                  # (num_structures,)


def _reference(pos, mapping, mapping_batch, atom_types, x0_table, k_table, num_structures):
    """Pure-JAX reference (mirrors the PyTorch forward) for a sanity check."""
    dr1 = pos[mapping[1]] - pos[mapping[0]]
    dr2 = pos[mapping[2]] - pos[mapping[1]]
    dr3 = pos[mapping[3]] - pos[mapping[2]]
    n1 = jnp.cross(dr1, dr2)
    n2 = jnp.cross(dr2, dr3)
    m1 = jnp.cross(n1, dr2 / jnp.linalg.norm(dr2, axis=1, keepdims=True))
    theta = jnp.arctan2((m1 * n2).sum(-1), (n1 * n2).sum(-1))
    theta = jnp.where(theta < 0.0, theta + TWO_PI, theta) - PI
    it = atom_types[mapping]
    x0 = x0_table[it[0], it[1], it[2], it[3]]
    k = k_table[it[0], it[1], it[2], it[3]]
    e = k * (theta - x0) ** 2
    return jax.ops.segment_sum(e, mapping_batch, num_segments=num_structures)


if __name__ == "__main__":
    key = jax.random.PRNGKey(0)
    k_pos, k_types = jax.random.split(key)

    num_structures = 2          # B
    atoms_per_struct = 16
    N = num_structures * atoms_per_struct      # 32 atoms total
    impropers_per_struct = 8
    M = num_structures * impropers_per_struct  # 16 interactions
    T = 4                        # number of bead types (max_type + 1)

    # deterministic "statistics": order-4 parameter tables of shape (T, T, T, T)
    idx = jnp.indices((T, T, T, T))
    k_table = 1.0 + 0.05 * (idx[0] + 2 * idx[1] + 3 * idx[2] + 4 * idx[3]).astype(jnp.float32)
    x0_table = 0.1 * (idx[0] - idx[1] + idx[2] - idx[3]).astype(jnp.float32)

    # atom positions and types
    pos = jax.random.normal(k_pos, (N, 3), dtype=jnp.float32) * 2.0
    atom_types = jax.random.randint(k_types, (N,), 0, T, dtype=jnp.int32)

    # impropers: consecutive atom quadruples within each structure
    mapping_np = np.zeros((4, M), dtype=np.int32)
    batch_np = np.zeros((M,), dtype=np.int32)
    col = 0
    for b in range(num_structures):
        base = b * atoms_per_struct
        for i in range(impropers_per_struct):
            mapping_np[:, col] = [base + i, base + i + 1, base + i + 2, base + i + 3]
            batch_np[col] = b
            col += 1
    mapping = jnp.asarray(mapping_np)
    mapping_batch = jnp.asarray(batch_np)

    energy = shifted_periodic_harmonic_impropers(
        pos, mapping, mapping_batch, atom_types, x0_table, k_table, num_structures)
    energy = jax.block_until_ready(energy)

    ref = jax.block_until_ready(_reference(
        pos, mapping, mapping_batch, atom_types, x0_table, k_table, num_structures))
    assert energy.shape == (num_structures,)
    assert np.allclose(np.asarray(energy), np.asarray(ref), rtol=1e-4, atol=1e-4)

    print("KERNEL_OK")
</pallas_src>

<mosaic_0001>
module attributes {stable_mosaic.version = 11 : i64} {
  func.func @improper_energy_kernel(%arg0: i32, %arg1: memref<1xi32, #tpu.memory_space<smem>>, %arg2: memref<1xi32, #tpu.memory_space<smem>>, %arg3: memref<14x8x128xf32, #tpu.memory_space<vmem>>, %arg4: memref<8x128xi32, #tpu.memory_space<vmem>>, %arg5: memref<2x128xf32, #tpu.memory_space<vmem>>) attributes {dimension_semantics = [#tpu.dimension_semantics<parallel>], iteration_bounds = array<i64: 1>, scalar_prefetch = 2 : i64, scratch_operands = 0 : i64, tpu.core_type = #tpu.core_type<tc>, window_params = [{transform_indices = @transform_0, window_bounds = array<i64: 14, 8, 128>}, {transform_indices = @transform_1, window_bounds = array<i64: 8, 128>}, {transform_indices = @transform_2, window_bounds = array<i64: 2, 128>}]} {
    %c3 = arith.constant 3 : index
    %c0 = arith.constant 0 : index
    %c0_0 = arith.constant 0 : index
    %0 = vector.load %arg3[%c3, %c0, %c0_0] : memref<14x8x128xf32, #tpu.memory_space<vmem>>, vector<1x8x128xf32>
    %1 = vector.shape_cast %0 : vector<1x8x128xf32> to vector<8x128xf32>
    %c0_1 = arith.constant 0 : index
    %c0_2 = arith.constant 0 : index
    %c0_3 = arith.constant 0 : index
    %2 = vector.load %arg3[%c0_1, %c0_2, %c0_3] : memref<14x8x128xf32, #tpu.memory_space<vmem>>, vector<1x8x128xf32>
    %3 = vector.shape_cast %2 : vector<1x8x128xf32> to vector<8x128xf32>
    %4 = arith.subf %1, %3 : vector<8x128xf32>
    %c4 = arith.constant 4 : index
    %c0_4 = arith.constant 0 : index
    %c0_5 = arith.constant 0 : index
    %5 = vector.load %arg3[%c4, %c0_4, %c0_5] : memref<14x8x128xf32, #tpu.memory_space<vmem>>, vector<1x8x128xf32>
    %6 = vector.shape_cast %5 : vector<1x8x128xf32> to vector<8x128xf32>
    %c1 = arith.constant 1 : index
    %c0_6 = arith.constant 0 : index
    %c0_7 = arith.constant 0 : index
    %7 = vector.load %arg3[%c1, %c0_6, %c0_7] : memref<14x8x128xf32, #tpu.memory_space<vmem>>, vector<1x8x128xf32>
    %8 = vector.shape_cast %7 : vector<1x8x128xf32> to vector<8x128xf32>
    %9 = arith.subf %6, %8 : vector<8x128xf32>
    %c5 = arith.constant 5 : index
    %c0_8 = arith.constant 0 : index
    %c0_9 = arith.constant 0 : index
    %10 = vector.load %arg3[%c5, %c0_8, %c0_9] : memref<14x8x128xf32, #tpu.memory_space<vmem>>, vector<1x8x128xf32>
    %11 = vector.shape_cast %10 : vector<1x8x128xf32> to vector<8x128xf32>
    %c2 = arith.constant 2 : index
    %c0_10 = arith.constant 0 : index
    %c0_11 = arith.constant 0 : index
    %12 = vector.load %arg3[%c2, %c0_10, %c0_11] : memref<14x8x128xf32, #tpu.memory_space<vmem>>, vector<1x8x128xf32>
    %13 = vector.shape_cast %12 : vector<1x8x128xf32> to vector<8x128xf32>
    %14 = arith.subf %11, %13 : vector<8x128xf32>
    %c6 = arith.constant 6 : index
    %c0_12 = arith.constant 0 : index
    %c0_13 = arith.constant 0 : index
    %15 = vector.load %arg3[%c6, %c0_12, %c0_13] : memref<14x8x128xf32, #tpu.memory_space<vmem>>, vector<1x8x128xf32>
    %16 = vector.shape_cast %15 : vector<1x8x128xf32> to vector<8x128xf32>
    %c3_14 = arith.constant 3 : index
    %c0_15 = arith.constant 0 : index
    %c0_16 = arith.constant 0 : index
    %17 = vector.load %arg3[%c3_14, %c0_15, %c0_16] : memref<14x8x128xf32, #tpu.memory_space<vmem>>, vector<1x8x128xf32>
    %18 = vector.shape_cast %17 : vector<1x8x128xf32> to vector<8x128xf32>
    %19 = arith.subf %16, %18 : vector<8x128xf32>
    %c7 = arith.constant 7 : index
    %c0_17 = arith.constant 0 : index
    %c0_18 = arith.constant 0 : index
    %20 = vector.load %arg3[%c7, %c0_17, %c0_18] : memref<14x8x128xf32, #tpu.memory_space<vmem>>, vector<1x8x128xf32>
    %21 = vector.shape_cast %20 : vector<1x8x128xf32> to vector<8x128xf32>
    %c4_19 = arith.constant 4 : index
    %c0_20 = arith.constant 0 : index
    %c0_21 = arith.constant 0 : index
    %22 = vector.load %arg3[%c4_19, %c0_20, %c0_21] : memref<14x8x128xf32, #tpu.memory_space<vmem>>, vector<1x8x128xf32>
    %23 = vector.shape_cast %22 : vector<1x8x128xf32> to vector<8x128xf32>
    %24 = arith.subf %21, %23 : vector<8x128xf32>
    %c8 = arith.constant 8 : index
    %c0_22 = arith.constant 0 : index
    %c0_23 = arith.constant 0 : index
    %25 = vector.load %arg3[%c8, %c0_22, %c0_23] : memref<14x8x128xf32, #tpu.memory_space<vmem>>, vector<1x8x128xf32>
    %26 = vector.shape_cast %25 : vector<1x8x128xf32> to vector<8x128xf32>
    %c5_24 = arith.constant 5 : index
    %c0_25 = arith.constant 0 : index
    %c0_26 = arith.constant 0 : index
    %27 = vector.load %arg3[%c5_24, %c0_25, %c0_26] : memref<14x8x128xf32, #tpu.memory_space<vmem>>, vector<1x8x128xf32>
    %28 = vector.shape_cast %27 : vector<1x8x128xf32> to vector<8x128xf32>
    %29 = arith.subf %26, %28 : vector<8x128xf32>
    %c9 = arith.constant 9 : index
    %c0_27 = arith.constant 0 : index
    %c0_28 = arith.constant 0 : index
    %30 = vector.load %arg3[%c9, %c0_27, %c0_28] : memref<14x8x128xf32, #tpu.memory_space<vmem>>, vector<1x8x128xf32>
    %31 = vector.shape_cast %30 : vector<1x8x128xf32> to vector<8x128xf32>
    %c6_29 = arith.constant 6 : index
    %c0_30 = arith.constant 0 : index
    %c0_31 = arith.constant 0 : index
    %32 = vector.load %arg3[%c6_29, %c0_30, %c0_31] : memref<14x8x128xf32, #tpu.memory_space<vmem>>, vector<1x8x128xf32>
    %33 = vector.shape_cast %32 : vector<1x8x128xf32> to vector<8x128xf32>
    %34 = arith.subf %31, %33 : vector<8x128xf32>
    %c10 = arith.constant 10 : index
    %c0_32 = arith.constant 0 : index
    %c0_33 = arith.constant 0 : index
    %35 = vector.load %arg3[%c10, %c0_32, %c0_33] : memref<14x8x128xf32, #tpu.memory_space<vmem>>, vector<1x8x128xf32>
    %36 = vector.shape_cast %35 : vector<1x8x128xf32> to vector<8x128xf32>
    %c7_34 = arith.constant 7 : index
    %c0_35 = arith.constant 0 : index
    %c0_36 = arith.constant 0 : index
    %37 = vector.load %arg3[%c7_34, %c0_35, %c0_36] : memref<14x8x128xf32, #tpu.memory_space<vmem>>, vector<1x8x128xf32>
    %38 = vector.shape_cast %37 : vector<1x8x128xf32> to vector<8x128xf32>
    %39 = arith.subf %36, %38 : vector<8x128xf32>
    %c11 = arith.constant 11 : index
    %c0_37 = arith.constant 0 : index
    %c0_38 = arith.constant 0 : index
    %40 = vector.load %arg3[%c11, %c0_37, %c0_38] : memref<14x8x128xf32, #tpu.memory_space<vmem>>, vector<1x8x128xf32>
    %41 = vector.shape_cast %40 : vector<1x8x128xf32> to vector<8x128xf32>
    %c8_39 = arith.constant 8 : index
    %c0_40 = arith.constant 0 : index
    %c0_41 = arith.constant 0 : index
    %42 = vector.load %arg3[%c8_39, %c0_40, %c0_41] : memref<14x8x128xf32, #tpu.memory_space<vmem>>, vector<1x8x128xf32>
    %43 = vector.shape_cast %42 : vector<1x8x128xf32> to vector<8x128xf32>
    %44 = arith.subf %41, %43 : vector<8x128xf32>
    %45 = arith.mulf %9, %29 : vector<8x128xf32>
    %46 = arith.mulf %14, %24 : vector<8x128xf32>
    %47 = arith.subf %45, %46 : vector<8x128xf32>
    %48 = arith.mulf %14, %19 : vector<8x128xf32>
    %49 = arith.mulf %4, %29 : vector<8x128xf32>
    %50 = arith.subf %48, %49 : vector<8x128xf32>
    %51 = arith.mulf %4, %24 : vector<8x128xf32>
    %52 = arith.mulf %9, %19 : vector<8x128xf32>
    %53 = arith.subf %51, %52 : vector<8x128xf32>
    %54 = arith.mulf %24, %44 : vector<8x128xf32>
    %55 = arith.mulf %29, %39 : vector<8x128xf32>
    %56 = arith.subf %54, %55 : vector<8x128xf32>
    %57 = arith.mulf %29, %34 : vector<8x128xf32>
    %58 = arith.mulf %19, %44 : vector<8x128xf32>
    %59 = arith.subf %57, %58 : vector<8x128xf32>
    %60 = arith.mulf %19, %39 : vector<8x128xf32>
    %61 = arith.mulf %24, %34 : vector<8x128xf32>
    %62 = arith.subf %60, %61 : vector<8x128xf32>
    %63 = arith.mulf %47, %56 : vector<8x128xf32>
    %64 = arith.mulf %50, %59 : vector<8x128xf32>
    %65 = arith.addf %63, %64 : vector<8x128xf32>
    %66 = arith.mulf %53, %62 : vector<8x128xf32>
    %67 = arith.addf %65, %66 : vector<8x128xf32>
    %68 = arith.mulf %19, %19 : vector<8x128xf32>
    %69 = arith.mulf %24, %24 : vector<8x128xf32>
    %70 = arith.addf %68, %69 : vector<8x128xf32>
    %71 = arith.mulf %29, %29 : vector<8x128xf32>
    %72 = arith.addf %70, %71 : vector<8x128xf32>
    %73 = math.sqrt %72 : vector<8x128xf32>
    %cst = arith.constant 0.000000e+00 : f32
    %74 = vector.broadcast %cst : f32 to vector<8x128xf32>
    %75 = arith.subf %74, %73 : vector<8x128xf32>
    %76 = arith.mulf %4, %56 : vector<8x128xf32>
    %77 = arith.mulf %9, %59 : vector<8x128xf32>
    %78 = arith.addf %76, %77 : vector<8x128xf32>
    %79 = arith.mulf %14, %62 : vector<8x128xf32>
    %80 = arith.addf %78, %79 : vector<8x128xf32>
    %81 = arith.mulf %75, %80 : vector<8x128xf32>
    %82 = math.atan2 %81, %67 : vector<8x128xf32>
    %cst_42 = arith.constant 0.000000e+00 : f32
    %83 = vector.broadcast %cst_42 : f32 to vector<8x128xf32>
    %84 = arith.cmpf olt, %82, %83 : vector<8x128xf32>
    %cst_43 = arith.constant 6.28318548 : f32
    %85 = vector.broadcast %cst_43 : f32 to vector<8x128xf32>
    %86 = arith.addf %82, %85 : vector<8x128xf32>
    %87 = arith.select %84, %86, %82 : vector<8x128xi1>, vector<8x128xf32>
    %cst_44 = arith.constant 3.14159274 : f32
    %88 = vector.broadcast %cst_44 : f32 to vector<8x128xf32>
    %89 = arith.subf %87, %88 : vector<8x128xf32>
    %c12 = arith.constant 12 : index
    %c0_45 = arith.constant 0 : index
    %c0_46 = arith.constant 0 : index
    %90 = vector.load %arg3[%c12, %c0_45, %c0_46] : memref<14x8x128xf32, #tpu.memory_space<vmem>>, vector<1x8x128xf32>
    %91 = vector.shape_cast %90 : vector<1x8x128xf32> to vector<8x128xf32>
    %c13 = arith.constant 13 : index
    %c0_47 = arith.constant 0 : index
    %c0_48 = arith.constant 0 : index
    %92 = vector.load %arg3[%c13, %c0_47, %c0_48] : memref<14x8x128xf32, #tpu.memory_space<vmem>>, vector<1x8x128xf32>
    %93 = vector.shape_cast %92 : vector<1x8x128xf32> to vector<8x128xf32>
    %94 = arith.subf %89, %91 : vector<8x128xf32>
    %95 = arith.mulf %94, %94 : vector<8x128xf32>
    %96 = arith.mulf %93, %95 : vector<8x128xf32>
    %c0_49 = arith.constant 0 : index
    %c0_50 = arith.constant 0 : index
    %97 = vector.load %arg4[%c0_49, %c0_50] : memref<8x128xi32, #tpu.memory_space<vmem>>, vector<8x128xi32>
    %cst_51 = arith.constant 0.000000e+00 : f32
    %98 = vector.broadcast %cst_51 : f32 to vector<2x128xf32>
    %c0_52 = arith.constant 0 : index
    %c0_53 = arith.constant 0 : index
    %99 = vector.load %arg5[%c0_52, %c0_53] : memref<2x128xf32, #tpu.memory_space<vmem>>, vector<2x128xf32>
    tpu.vector_store %arg5[%c0_52, %c0_53], %98 {strides = array<i32>} : memref<2x128xf32, #tpu.memory_space<vmem>>, vector<2x128xf32>,
    %100 = tpu.iota {dimensions = array<i32: 0>} : vector<2x128xi32>
    %101 = arith.index_cast %arg0 : i32 to index
    %102 = memref.load %arg1[%101] : memref<1xi32, #tpu.memory_space<smem>>
    %103 = arith.index_cast %arg0 : i32 to index
    %104 = memref.load %arg2[%103] : memref<1xi32, #tpu.memory_space<smem>>
    %c0_i32 = arith.constant 0 : i32
    %105 = arith.subi %104, %102 : i32
    %106 = arith.addi %102, %105 : i32
    %c1_i32 = arith.constant 1 : i32
    scf.for %arg6 = %102 to %106 step %c1_i32  : i32 {
      %107 = vector.broadcast %arg6 : i32 to vector<8x128xi32>
      %108 = arith.cmpi eq, %97, %107 : vector<8x128xi32>
      %cst_54 = arith.constant 0.000000e+00 : f32
      %109 = vector.broadcast %cst_54 : f32 to vector<8x128xf32>
      %110 = arith.select %108, %96, %109 : vector<8x128xi1>, vector<8x128xf32>
      %cst_55 = arith.constant dense<0.000000e+00> : vector<128xf32>
      %111 = vector.multi_reduction <add>, %110, %cst_55 [0] : vector<8x128xf32> to vector<128xf32>
      %112 = vector.shape_cast %111 : vector<128xf32> to vector<1x128xf32>
      %c0_56 = arith.constant 0 : index
      %c0_57 = arith.constant 0 : index
      %113 = vector.load %arg5[%c0_56, %c0_57] : memref<2x128xf32, #tpu.memory_space<vmem>>, vector<2x128xf32>
      %114 = vector.broadcast %arg6 : i32 to vector<2x128xi32>
      %115 = arith.cmpi eq, %100, %114 : vector<2x128xi32>
      %cst_58 = arith.constant 0.000000e+00 : f32
      %116 = vector.shape_cast %112 : vector<1x128xf32> to vector<1x128xf32>
      %117 = vector.broadcast %116 : vector<1x128xf32> to vector<2x128xf32>
      %118 = vector.broadcast %cst_58 : f32 to vector<2x128xf32>
      %119 = arith.select %115, %117, %118 : vector<2x128xi1>, vector<2x128xf32>
      %120 = arith.addf %113, %119 : vector<2x128xf32>
      %c0_59 = arith.constant 0 : index
      %c0_60 = arith.constant 0 : index
      %121 = vector.load %arg5[%c0_59, %c0_60] : memref<2x128xf32, #tpu.memory_space<vmem>>, vector<2x128xf32>
      tpu.vector_store %arg5[%c0_59, %c0_60], %120 {strides = array<i32>} : memref<2x128xf32, #tpu.memory_space<vmem>>, vector<2x128xf32>,
    }
    return
  }
  func.func @transform_0(%arg0: i32, %arg1: memref<1xi32, #tpu.memory_space<smem>>, %arg2: memref<1xi32, #tpu.memory_space<smem>>) -> (i32, i32, i32) {
    %c0_i32 = arith.constant 0 : i32
    %c0_i32_0 = arith.constant 0 : i32
    %c0_i32_1 = arith.constant 0 : i32
    return %c0_i32, %arg0, %c0_i32_0 : i32, i32, i32
  }
  func.func @transform_1(%arg0: i32, %arg1: memref<1xi32, #tpu.memory_space<smem>>, %arg2: memref<1xi32, #tpu.memory_space<smem>>) -> (i32, i32) {
    %c0_i32 = arith.constant 0 : i32
    %c0_i32_0 = arith.constant 0 : i32
    return %arg0, %c0_i32 : i32, i32
  }
  func.func @transform_2(%arg0: i32, %arg1: memref<1xi32, #tpu.memory_space<smem>>, %arg2: memref<1xi32, #tpu.memory_space<smem>>) -> (i32, i32) {
    %c0_i32 = arith.constant 0 : i32
    %c0_i32_0 = arith.constant 0 : i32
    return %c0_i32, %arg0 : i32, i32
  }
}

</mosaic_0001>

<llo_original>
// kernel: tpu_custom_call.1
$region0: #{tpu_custom_call.1}
  #allocation0 [shape = 'u32[]', space=smem, size = 0x4, offset = 0x4, fixed_abs, tag = 'smem constant byte address 0x4 - core index']
  #allocation1 [shape = 'u32[72,128]{1,0:T(1,128)}', space=vmem, size = 0x9000, scoped, tag = 'internal scratch']
  #allocation2 [shape = 's32[1]{0}', space=sflag, size = 0x4, scoped, tag = 'scoped memory for tpu_custom_call.1']
  #allocation3 [shape = 's32[1]{0:T(128)S(6)}', space=smem, size = 0x200, scoped, tag = 'prefetched SMEM operand 0']
  #allocation4 [shape = 's32[1]{0:T(128)S(6)}', space=smem, size = 0x200, scoped, tag = 'prefetched SMEM operand 1']
  %s0 = inlined_call_operand.<no memory space> [shape: s32[1], index: 0, kind: input, shape index: {}]
  %s1 = inlined_call_operand.<no memory space> [shape: s32[1], index: 1, kind: input, shape index: {}]
  %s2 = inlined_call_operand.hbm [shape: f32[14,8,128], index: 2, kind: input, shape index: {}]
  %s3 = inlined_call_operand.hbm [shape: s32[8,128], index: 3, kind: input, shape index: {}]
  %s4 = inlined_call_operand.hbm [shape: f32[2,128], index: 4, kind: output, shape index: {}]
  %s5 = sld [smem:[#allocation0]]
  $region33: #{tpu_custom_call.1} parent=0
    _
  %s7 = ssub.s32 1, %s5
  %s8 = scalar_select 0, %s7, %s5
  %9 = sst [smem:[#allocation3]] %s0
  %10 = sst [smem:[#allocation4]] %s1
  $region1: #{tpu_custom_call.1} parent=0
    #allocation5 [shape = 'u8[57344]{0}', space=vmem, size = 0xe000, scoped, tag = 'input window, operand 2, single buffered']
    #allocation6 [shape = 's32[1]{0}', space=sflag, size = 0x4, scoped, tag = 'scoped memory for tpu_custom_call.1']
    #allocation7 [shape = 's32[1]{0}', space=sflag, size = 0x4, scoped, tag = 'scoped memory for tpu_custom_call.1']
    #allocation8 [shape = 'u8[4096]{0}', space=vmem, size = 0x1000, scoped, tag = 'input window, operand 3, single buffered']
    #allocation9 [shape = 's32[1]{0}', space=sflag, size = 0x4, scoped, tag = 'scoped memory for tpu_custom_call.1']
    #allocation10 [shape = 'u8[1024]{0}', space=vmem, size = 0x400, scoped, tag = 'output window, operand 0, single buffered']
    %11 = vsyncpa [#allocation6], 0
    %12 = vsyncpa [#allocation9], 0
    %13 = vsyncpa [#allocation7], 0
    // Predicated region
    $region2: #{tpu_custom_call.1} parent=1 // pred_check
      _
    $region3: #{tpu_custom_call.1} parent=1 // pred_check_branch
      %15 = sbr.rel (0) target = $region5
    $region4: #{tpu_custom_call.1} parent=1 // pred_region
      %17 = vsyncadd [#allocation6], 0
      %s18 = sshll.u32 %s2, 4
      %s19 = int_to_ptr.hbm [resolvable:$true] %s18
      %s20 = sshll.u32 [#allocation5], 4
      %s21 = int_to_ptr.vmem [resolvable:$true] %s20
      %26 = dma.hbm_to_vmem [thread:$0]  %s19, 1792, %s21, [#allocation6], 128, 128, 8
    $region5: #{tpu_custom_call.1} parent=1 // pred_fallthru
      _
    // Predicated region
    $region6: #{tpu_custom_call.1} parent=1 // pred_check
      _
    $region7: #{tpu_custom_call.1} parent=1 // pred_check_branch
      %28 = sbr.rel (0) target = $region9
    $region8: #{tpu_custom_call.1} parent=1 // pred_region
      %30 = vsyncadd [#allocation9], 0
      %s32 = sshll.u32 %s3, 4
      %s33 = int_to_ptr.hbm [resolvable:$true] %s32
      %s34 = sshll.u32 [#allocation8], 4
      %s35 = int_to_ptr.vmem [resolvable:$true] %s34
      %37 = dma.hbm_to_vmem [thread:$0]  %s33, 128, %s35, [#allocation9]
    $region9: #{tpu_custom_call.1} parent=1 // pred_fallthru
      _
    // Predicated region
    $region10: #{tpu_custom_call.1} parent=1 // pred_check
      _
    $region11: #{tpu_custom_call.1} parent=1 // pred_check_branch
      %39 = sbr.rel (0) target = $region13
    $region12: #{tpu_custom_call.1} parent=1 // pred_region
      %41 = dma.done [#allocation6], 1792
    $region13: #{tpu_custom_call.1} parent=1 // pred_fallthru
      _
    // Predicated region
    $region14: #{tpu_custom_call.1} parent=1 // pred_check
      _
    $region15: #{tpu_custom_call.1} parent=1 // pred_check_branch
      %43 = sbr.rel (0) target = $region17
    $region16: #{tpu_custom_call.1} parent=1 // pred_region
      %45 = dma.done [#allocation9], 128
    $region17: #{tpu_custom_call.1} parent=1 // pred_fallthru
      _
    %s46 = scalar_lea.vmem [#allocation5], 24
    %v47 = vld [vmem:[%s46] sm:$0xff]
    %v48 = vld [vmem:[#allocation5] sm:$0xff]
    %v49 = vsub.f32 %v47, %v48
    %s50 = scalar_lea.vmem [#allocation5], 32
    %v51 = vld [vmem:[%s50] sm:$0xff]
    %s52 = scalar_lea.vmem [#allocation5], 8
    %v53 = vld [vmem:[%s52] sm:$0xff]
    %v54 = vsub.f32 %v51, %v53
    %s55 = scalar_lea.vmem [#allocation5], 40
    %v56 = vld [vmem:[%s55] sm:$0xff]
    %s57 = scalar_lea.vmem [#allocation5], 16
    %v58 = vld [vmem:[%s57] sm:$0xff]
    %v59 = vsub.f32 %v56, %v58
    %s60 = scalar_lea.vmem [#allocation5], 48
    %v61 = vld [vmem:[%s60] sm:$0xff]
    %v62 = vsub.f32 %v61, %v47
    %s63 = scalar_lea.vmem [#allocation5], 56
    %v64 = vld [vmem:[%s63] sm:$0xff]
    %v65 = vsub.f32 %v64, %v51
    %s66 = scalar_lea.vmem [#allocation5], 64
    %v67 = vld [vmem:[%s66] sm:$0xff]
    %v68 = vsub.f32 %v67, %v56
    %s69 = scalar_lea.vmem [#allocation5], 72
    %v70 = vld [vmem:[%s69] sm:$0xff]
    %v71 = vsub.f32 %v70, %v61
    %s72 = scalar_lea.vmem [#allocation5], 80
    %v73 = vld [vmem:[%s72] sm:$0xff]
    %v74 = vsub.f32 %v73, %v64
    %s75 = scalar_lea.vmem [#allocation5], 88
    %v76 = vld [vmem:[%s75] sm:$0xff]
    %v77 = vsub.f32 %v76, %v67
    %v78 = vmul.f32 %v54, %v68
    %v79 = vmul.f32 %v59, %v65
    %v80 = vsub.f32 %v78, %v79
    %v81 = vmul.f32 %v59, %v62
    %v82 = vmul.f32 %v49, %v68
    %v83 = vsub.f32 %v81, %v82
    %v84 = vmul.f32 %v49, %v65
    %v85 = vmul.f32 %v54, %v62
    %v86 = vsub.f32 %v84, %v85
    %v87 = vmul.f32 %v65, %v77
    %v88 = vmul.f32 %v68, %v74
    %v89 = vsub.f32 %v87, %v88
    %v90 = vmul.f32 %v68, %v71
    %v91 = vmul.f32 %v62, %v77
    %v92 = vsub.f32 %v90, %v91
    %v93 = vmul.f32 %v62, %v74
    %v94 = vmul.f32 %v65, %v71
    %v95 = vsub.f32 %v93, %v94
    %v96 = vmul.f32 %v80, %v89
    %v97 = vmul.f32 %v83, %v92
    %v98 = vadd.f32 %v96, %v97
    %v99 = vmul.f32 %v86, %v95
    %v100 = vadd.f32 %v98, %v99
    %v101 = vmul.f32 %v62, %v62
    %v102 = vmul.f32 %v65, %v65
    %v103 = vadd.f32 %v101, %v102
    %v104 = vmul.f32 %v68, %v68
    %v105 = vadd.f32 %v103, %v104
    %v106 = vrsqrt.pop %v105
    %v107 = vmul.f32 %v106, %v105
    %v108 = vmul.f32 %v107, %v106
    %v109 = vmul.f32 0.5, %v108
    %v110 = vsub.f32 1.5, %v109
    %v111 = vmul.f32 %v106, %v110
    %v112 = vmul.f32 %v105, %v111
    %vm113 = vcmp.eq.f32.partialorder %v105, inf
    %v114 = vsel %vm113, %v105, %v112
    %vm115 = vcmp.eq.f32.partialorder %v105, 0.0
    %v116 = vand.u32 %v105, 2147483648
    %v117 = vsel %vm115, %v116, %v114
    %v118 = vsub.f32 0.0, %v117
    %v119 = vmul.f32 %v49, %v89
    %v120 = vmul.f32 %v54, %v92
    %v121 = vadd.f32 %v119, %v120
    %v122 = vmul.f32 %v59, %v95
    %v123 = vadd.f32 %v121, %v122
    %v124 = vmul.f32 %v118, %v123
    %v125 = vand.u32 2147483647, %v100
    %v126 = vand.u32 2147483647, %v124
    %v127 = vmin.f32 %v125, %v126
    %v128 = vmax.f32 %v125, %v126
    %v129 = vrcp.pop %v128
    %v130 = vmul.f32 %v128, %v129
    %v131 = vsub.f32 1.0, %v130
    %v132 = vmul.f32 %v129, %v131
    %v133 = vadd.f32 %v129, %v132
    %vm134 = vweird.f32 %v128
    %vm135 = vweird.f32 %v129
    %vm136 = vmor %vm134, %vm135
    %v137 = vsel %vm136, %v129, %v133
    %v138 = vand.u32 2147483647, %v128
    %vm139 = vcmp.eq.f32.partialorder %v138, 8.507059e+37
    %v140 = vand.u32 %v128, 2147483648
    %v141 = vor.u32 1.1754944e-38, %v140
    %v142 = vsel %vm139, %v141, %v137
    %v143 = vmul.f32 %v127, %v142
    %v144 = vmul.f32 %v143, %v143
    %v145 = vmul.f32 0.002785687, %v144
    %v146 = vadd.f32 %v145, -0.015866
    %v147 = vmul.f32 %v146, %v144
    %v148 = vadd.f32 %v147, 0.04247222
    %v149 = vmul.f32 %v148, %v144
    %v150 = vadd.f32 %v149, -0.074975304
    %v151 = vmul.f32 %v150, %v144
    %v152 = vadd.f32 %v151, 0.1064488
    %v153 = vmul.f32 %v152, %v144
    %v154 = vadd.f32 %v153, -0.14207031
    %v155 = vmul.f32 %v154, %v144
    %v156 = vadd.f32 %v155, 0.19993454
    %v157 = vmul.f32 %v156, %v144
    %v158 = vadd.f32 %v157, -0.33333147
    %v159 = vmul.f32 %v158, %v144
    %v160 = vmul.f32 %v159, %v143
    %v161 = vadd.f32 %v160, %v143
    %vm162 = vcmp.gt.f32.partialorder %v126, %v125
    %v163 = vsub.f32 1.5707964, %v161
    %v164 = vsel %vm162, %v163, %v161
    %vm165 = vcmp.lt.f32.partialorder %v100, 0.0
    %v166 = vsub.f32 3.1415927, %v164
    %v167 = vsel %vm165, %v166, %v164
    %vm168 = vcmp.lt.s32.totalorder %v100, 0
    %v169 = vsel %vm168, 3.1415927, 0.0
    %vm170 = vcmp.eq.f32.partialorder %v124, 0.0
    %v171 = vsel %vm170, %v169, %v167
    %vm172 = vcmp.ne.f32.partialorder %v100, %v100
    %vm173 = vcmp.ne.f32.partialorder %v124, %v124
    %vm174 = vmor %vm172, %vm173
    %v175 = vsel %vm174, nan, %v171
    %vm176 = vcmp.lt.f32.partialorder %v100, 0.0
    %v177 = vsel %vm176, 2.3561945, 0.7853982
    %vm178 = vcmp.eq.s32.totalorder %v125, inf
    %vm179 = vcmp.eq.s32.totalorder %v126, inf
    %vm180 = vmand %vm178, %vm179
    %v181 = vsel %vm180, %v177, %v175
    %v182 = vand.u32 2147483647, %v181
    %v183 = vand.u32 %v124, 2147483648
    %v184 = vor.u32 %v182, %v183
    %vm185 = vcmp.lt.f32.partialorder %v184, 0.0
    %v186 = vadd.f32 %v184, 6.2831855
    %v187 = vsel %vm185, %v186, %v184
    %v188 = vsub.f32 %v187, 3.1415927
    %s189 = scalar_lea.vmem [#allocation5], 96
    %v190 = vld [vmem:[%s189] sm:$0xff]
    %s191 = scalar_lea.vmem [#allocation5], 104
    %v192 = vld [vmem:[%s191] sm:$0xff]
    %v193 = vsub.f32 %v188, %v190
    %v194 = vmul.f32 %v193, %v193
    %v195 = vmul.f32 %v192, %v194
    %v196 = vld [vmem:[#allocation8] sm:$0xff]
    %197 = vst [vmem:[#allocation10] sm:$0x3] 0.0
    %v198 = vlaneseq
    %v199 = vshrl.u32 %v198, 7
    %s200 = sld [smem:[#allocation3]]
    %s201 = sld [smem:[#allocation4]]
    // While loop
    $region18: #{tpu_custom_call.1} parent=1 // loop_pre_header
      _
    $region19: #{tpu_custom_call.1} parent=1 // loop_header
      %s203 = sphi %s200, %s205
      %p204 = scmp.ge.s32.totalorder %s203, %s201
    $region20: #{tpu_custom_call.1} parent=1 // loop_header_branch
      %207 = sbr.rel (%p204) target = $region24
    $region21: #{tpu_custom_call.1} parent=1 // loop_body
      %v208 = vstv %s203
      %vm209 = vcmp.eq.s32.totalorder %v196, %v208
      %v210 = vsel %vm209, %v195, 0.0
      %v211 = vrot.slane %v210, 4
      %v212 = vadd.f32 %v210, %v211
      %v213 = vrot.slane %v212, 2
      %v214 = vadd.f32 %v212, %v213
      %v215 = vrot.slane %v214, 1
      %v216 = vadd.f32 %v214, %v215
      %v217 = vld [vmem:[#allocation10] sm:$0x3]
      %vm218 = vcmp.eq.s32.totalorder %v199, %v208
      %v219 = vsel %vm218, %v216, 0.0
      %v220 = vadd.f32 %v217, %v219
      %221 = vst [vmem:[#allocation10] sm:$0x3] %v220
    $region22: #{tpu_custom_call.1} parent=1 // loop_footer
      %s205 = sadd.s32 %s203, 1
    $region23: #{tpu_custom_call.1} parent=1 // loop_footer_branch
      %202 = sbr.rel target = $region19
    $region24: #{tpu_custom_call.1} parent=1 // loop_exit
      _
    // Predicated region
    $region25: #{tpu_custom_call.1} parent=1 // pred_check
      _
    $region26: #{tpu_custom_call.1} parent=1 // pred_check_branch
      %223 = sbr.rel (0) target = $region28
    $region27: #{tpu_custom_call.1} parent=1 // pred_region
      %225 = vsyncadd [#allocation7], 0
      %s227 = sshll.u32 [#allocation10], 4
      %s228 = int_to_ptr.vmem [resolvable:$true] %s227
      %s229 = sshll.u32 %s4, 4
      %s230 = int_to_ptr.hbm [resolvable:$true] %s229
      %232 = dma.vmem_to_hbm [thread:$0]  %s228, 32, %s230, [#allocation7]
    $region28: #{tpu_custom_call.1} parent=1 // pred_fallthru
      _
    // Predicated region
    $region29: #{tpu_custom_call.1} parent=1 // pred_check
      _
    $region30: #{tpu_custom_call.1} parent=1 // pred_check_branch
      %234 = sbr.rel (0) target = $region32
    $region31: #{tpu_custom_call.1} parent=1 // pred_region
      %236 = dma.done [#allocation7], 32
    $region32: #{tpu_custom_call.1} parent=1 // pred_fallthru
      _
    %237 = vsyncpa [#allocation6], 1
    %238 = vsyncpa [#allocation9], 1
    %239 = vsyncpa [#allocation7], 1

</llo_original>
